<compile_context>
chip_gen: v7x
topology: tpu7x:2x2x1
jax: 0.10.0
libtpu: 0.0.40
codegen_flags: <defaults>
</compile_context>

<pallas_src>
import functools

import jax
import jax.numpy as jnp
from jax import lax
from jax.experimental import pallas as pl
from jax.experimental.pallas import tpu as pltpu

# Module-consistent (shrunk) sizes: the PyTorch module hardcodes n_embed=384,
# block_size=256; we keep H * hs == n_embed and T <= block_size, and pick T so
# the (q_tile, kv_tile) grid actually exercises multiple kv steps + block skip.
N_EMBED = 128
NUM_HEADS = 4
HEAD_SIZE = N_EMBED // NUM_HEADS
BATCH = 2
SEQ = 128                      # <= block_size, multiple of the tiles below
Q_TILE = 64
KV_TILE = 64
VMEM_LIMIT = 32 * 1024 * 1024  # explicit scoped-VMEM budget (fits v5e/v6e/v7x)


# --------------------------------------------------------------------------- #
# Kernel A: fused QKV projection, grid over row tiles of the flattened input. #
# --------------------------------------------------------------------------- #
def qkv_kernel(x_ref, wqkv_ref, q_ref, k_ref, v_ref):
    HE = q_ref.shape[-1]
    qkv = jnp.dot(x_ref[...], wqkv_ref[...],
                  preferred_element_type=jnp.float32)        # (tm, 3*HE) f32
    # 128-aligned lane slices (HE is a multiple of 128 at module sizes).
    q_ref[...] = qkv[:, 0 * HE:1 * HE].astype(q_ref.dtype)   # scale already folded
    k_ref[...] = qkv[:, 1 * HE:2 * HE].astype(k_ref.dtype)
    v_ref[...] = qkv[:, 2 * HE:3 * HE].astype(v_ref.dtype)


# --------------------------------------------------------------------------- #
# Kernel B: flash-style causal attention + fused output projection.           #
# Grid: (batch, q_tiles, kv_tiles); kv innermost / "arbitrary".               #
# --------------------------------------------------------------------------- #
def flash_attn_proj_kernel(q_ref, k_ref, v_ref, wproj_ref, bproj_ref, o_ref,
                           m_sc, l_sc, acc_sc, *, tq, tk):
    qi = pl.program_id(1)
    ki = pl.program_id(2)

    @pl.when(ki == 0)
    def _init():
        m_sc[...] = jnp.full(m_sc.shape, -jnp.inf, jnp.float32)
        l_sc[...] = jnp.zeros(l_sc.shape, jnp.float32)
        acc_sc[...] = jnp.zeros(acc_sc.shape, jnp.float32)

    # Causal block skipping: kv blocks entirely in the future contribute nothing.
    @pl.when(ki * tk < (qi + 1) * tq)
    def _compute():
        q = q_ref[0]                                    # (H, tq, hs)
        k = k_ref[0]                                    # (H, tk, hs)
        v = v_ref[0]                                    # (H, tk, hs)

        # Single batched-over-heads score matmul, f32 accumulation.
        s = jnp.einsum('hqd,hkd->hqk', q, k,
                       preferred_element_type=jnp.float32)   # (H, tq, tk)

        # Causal mask with global row/col offsets (finite fill -> NaN-safe).
        row = qi * tq + lax.broadcasted_iota(jnp.int32, (tq, tk), 0)
        col = ki * tk + lax.broadcasted_iota(jnp.int32, (tq, tk), 1)
        s = jnp.where((row >= col)[None, :, :], s, -1e30)

        # Online softmax update (state in VMEM scratch).
        m_prev = m_sc[...]                              # (H, tq, 1)
        m_new = jnp.maximum(m_prev, jnp.max(s, axis=-1, keepdims=True))
        alpha = jnp.exp(m_prev - m_new)
        p = jnp.exp(s - m_new)                          # (H, tq, tk) f32
        l_sc[...] = alpha * l_sc[...] + jnp.sum(p, axis=-1, keepdims=True)
        acc_sc[...] = alpha * acc_sc[...] + jnp.einsum(
            'hqk,hkd->hqd', p.astype(v.dtype), v,
            preferred_element_type=jnp.float32)         # (H, tq, hs)
        m_sc[...] = m_new

    @pl.when(ki == pl.num_programs(2) - 1)
    def _finalize():
        inv_l = 1.0 / l_sc[...]                         # exact reciprocal (fidelity)
        acc = acc_sc[...] * inv_l                       # (H, tq, hs) f32
        num_heads = acc.shape[0]
        # Concatenate heads along lanes -> (tq, HE); single K=HE projection.
        attn = jnp.concatenate([acc[h] for h in range(num_heads)], axis=-1)
        y = jnp.dot(attn.astype(wproj_ref.dtype), wproj_ref[...],
                    preferred_element_type=jnp.float32)  # (tq, C) f32
        y = y + bproj_ref[...].astype(jnp.float32)       # + (1, C) bias
        o_ref[0] = y.astype(o_ref.dtype)                 # lane-dense (tq, C) tile


def multi_head_attention(x, wq, wk, wv, wproj, bproj, *, num_heads=NUM_HEADS,
                         q_tile=128, kv_tile=128, row_tile=256):
    """x: (B, T, C); wq/wk/wv: (C, H*hs); wproj: (H*hs, C) [in, out]; bproj: (1, C)."""
    B, T, C = x.shape
    HE = wq.shape[1]
    hs = HE // num_heads
    dt = x.dtype

    tq = min(q_tile, T)
    tk = min(kv_tile, T)
    rows = B * T
    tm = min(row_tile, rows)
    assert T % tq == 0 and T % tk == 0 and rows % tm == 0, "tiles must divide sizes"
    assert tq % 8 == 0 and tk % 8 == 0 and tm % 8 == 0

    # Module scales scores by C**-0.5 with C = n_embed (not head_size): fold it
    # into the Q weight once, in f32, then cast back to the weight dtype.
    scale = C ** (-0.5)
    wq_scaled = (wq.astype(jnp.float32) * scale).astype(wq.dtype)
    wqkv = jnp.concatenate([wq_scaled, wk, wv], axis=1)          # (C, 3*HE)

    # ---- Kernel A: fused QKV projection over the flattened (B*T, C) slab.
    x2 = x.reshape(rows, C)
    q2, k2, v2 = pl.pallas_call(
        qkv_kernel,
        out_shape=[jax.ShapeDtypeStruct((rows, HE), dt)] * 3,
        grid_spec=pltpu.PrefetchScalarGridSpec(
            num_scalar_prefetch=0,
            grid=(rows // tm,),
            in_specs=[pl.BlockSpec((tm, C), lambda i: (i, 0)),
                      pl.BlockSpec((C, 3 * HE), lambda i: (0, 0))],
            out_specs=[pl.BlockSpec((tm, HE), lambda i: (i, 0))] * 3,
        ),
        compiler_params=pltpu.CompilerParams(
            dimension_semantics=("parallel",),
            vmem_limit_bytes=VMEM_LIMIT),
    )(x2, wqkv)

    # Layout plumbing (XLA, outside the kernel): heads become a leading batch
    # axis so the attention kernel never lane-slices at 32-element offsets.
    def heads_leading(a):
        return a.reshape(B, T, num_heads, hs).transpose(0, 2, 1, 3)   # (B, H, T, hs)

    q, k, v = heads_leading(q2), heads_leading(k2), heads_leading(v2)

    # ---- Kernel B: flash attention + fused output projection.
    kernel = functools.partial(flash_attn_proj_kernel, tq=tq, tk=tk)
    out = pl.pallas_call(
        kernel,
        out_shape=jax.ShapeDtypeStruct((B, T, C), dt),
        grid_spec=pltpu.PrefetchScalarGridSpec(
            num_scalar_prefetch=0,
            grid=(B, T // tq, T // tk),
            in_specs=[
                pl.BlockSpec((1, num_heads, tq, hs), lambda b, qi, ki: (b, 0, qi, 0)),
                pl.BlockSpec((1, num_heads, tk, hs), lambda b, qi, ki: (b, 0, ki, 0)),
                pl.BlockSpec((1, num_heads, tk, hs), lambda b, qi, ki: (b, 0, ki, 0)),
                pl.BlockSpec((HE, C), lambda b, qi, ki: (0, 0)),
                pl.BlockSpec((1, C), lambda b, qi, ki: (0, 0)),
            ],
            out_specs=pl.BlockSpec((1, tq, C), lambda b, qi, ki: (b, qi, 0)),
            scratch_shapes=[
                pltpu.VMEM((num_heads, tq, 1), jnp.float32),    # running max
                pltpu.VMEM((num_heads, tq, 1), jnp.float32),    # running denom
                pltpu.VMEM((num_heads, tq, hs), jnp.float32),   # output accumulator
            ],
        ),
        compiler_params=pltpu.CompilerParams(
            dimension_semantics=("parallel", "parallel", "arbitrary"),
            vmem_limit_bytes=VMEM_LIMIT),
    )(q, k, v, wproj, bproj)
    return out


def reference(x, wq, wk, wv, wproj, bproj, *, num_heads=NUM_HEADS):
    """Pure-JAX mirror of the PyTorch forward (f32)."""
    B, T, C = x.shape
    hs = wq.shape[1] // num_heads
    scale = C ** (-0.5)
    mask = jnp.tril(jnp.ones((T, T), dtype=bool))
    outs = []
    for h in range(num_heads):
        lo, hi = h * hs, (h + 1) * hs
        q = x @ wq[:, lo:hi]
        k = x @ wk[:, lo:hi]
        v = x @ wv[:, lo:hi]
        wei = (q @ jnp.swapaxes(k, -2, -1)) * scale
        wei = jnp.where(mask, wei, -jnp.inf)
        wei = jax.nn.softmax(wei, axis=-1)
        outs.append(wei @ v)
    cat = jnp.concatenate(outs, axis=-1)
    return cat @ wproj + bproj


if __name__ == "__main__":
    key = jax.random.PRNGKey(0)
    kx, kq, kk, kv, kw, kb = jax.random.split(key, 6)

    bound = 1.0 / (N_EMBED ** 0.5)   # deterministic stand-in for nn.Linear init
    x = jax.random.normal(kx, (BATCH, SEQ, N_EMBED), dtype=jnp.float32)
    wq = jax.random.uniform(kq, (N_EMBED, NUM_HEADS * HEAD_SIZE), jnp.float32, -bound, bound)
    wk = jax.random.uniform(kk, (N_EMBED, NUM_HEADS * HEAD_SIZE), jnp.float32, -bound, bound)
    wv = jax.random.uniform(kv, (N_EMBED, NUM_HEADS * HEAD_SIZE), jnp.float32, -bound, bound)
    wproj = jax.random.uniform(kw, (N_EMBED, N_EMBED), jnp.float32, -bound, bound)  # (in, out)
    bproj = jax.random.uniform(kb, (1, N_EMBED), jnp.float32, -bound, bound)

    ref = reference(x, wq, wk, wv, wproj, bproj)

    # f32 path (exact module semantics; tolerance covers online-softmax and
    # matmul-ordering drift).
    out = multi_head_attention(x, wq, wk, wv, wproj, bproj,
                               q_tile=Q_TILE, kv_tile=KV_TILE)
    out = jax.block_until_ready(out)
    assert out.shape == (BATCH, SEQ, N_EMBED)
    assert jnp.allclose(out, ref, atol=5e-3, rtol=5e-3), "f32 mismatch vs pure-JAX reference"

    # bf16-matmul path (recommended on v6e/v7x): cast activations/weights to bf16;
    # kernels keep f32 accumulation + f32 softmax (required on v5e).
    bf = jnp.bfloat16
    out_bf = multi_head_attention(x.astype(bf), wq.astype(bf), wk.astype(bf),
                                  wv.astype(bf), wproj.astype(bf), bproj.astype(bf),
                                  q_tile=Q_TILE, kv_tile=KV_TILE)
    out_bf = jax.block_until_ready(out_bf)
    assert jnp.allclose(out_bf.astype(jnp.float32), ref, atol=5e-2, rtol=5e-2), \
        "bf16 mismatch vs pure-JAX reference"

    print("KERNEL_OK")
</pallas_src>

<mosaic_0001>
module attributes {stable_mosaic.version = 11 : i64} {
  func.func @qkv_kernel(%arg0: i32, %arg1: memref<256x128xf32, #tpu.memory_space<vmem>>, %arg2: memref<128x384xf32, #tpu.memory_space<vmem>>, %arg3: memref<256x128xf32, #tpu.memory_space<vmem>>, %arg4: memref<256x128xf32, #tpu.memory_space<vmem>>, %arg5: memref<256x128xf32, #tpu.memory_space<vmem>>) attributes {dimension_semantics = [#tpu.dimension_semantics<parallel>], iteration_bounds = array<i64: 1>, scalar_prefetch = 0 : i64, scratch_operands = 0 : i64, tpu.core_type = #tpu.core_type<tc>, window_params = [{transform_indices = @transform_0, window_bounds = array<i64: 256, 128>}, {pipeline_mode = #tpu.pipeline_mode<synchronous>, transform_indices = @transform_1, window_bounds = array<i64: 128, 384>}, {transform_indices = @transform_2, window_bounds = array<i64: 256, 128>}, {transform_indices = @transform_3, window_bounds = array<i64: 256, 128>}, {transform_indices = @transform_4, window_bounds = array<i64: 256, 128>}]} {
    %c0 = arith.constant 0 : index
    %c0_0 = arith.constant 0 : index
    %0 = vector.load %arg1[%c0, %c0_0] : memref<256x128xf32, #tpu.memory_space<vmem>>, vector<256x128xf32>
    %c0_1 = arith.constant 0 : index
    %c0_2 = arith.constant 0 : index
    %1 = vector.load %arg2[%c0_1, %c0_2] : memref<128x384xf32, #tpu.memory_space<vmem>>, vector<128x384xf32>
    %cst = arith.constant dense<0.000000e+00> : vector<256x384xf32>
    %2 = tpu.matmul %0, %1, %cst {dimension_numbers = #tpu.dot_dimension_numbers<[1], [0], [0], [1], [0, 0, 1, 1], [], []>} : vector<256x128xf32>, vector<128x384xf32>, vector<256x384xf32> -> vector<256x384xf32>
    %3 = vector.extract_strided_slice %2 {offsets = [0, 0], sizes = [256, 128], strides = [1, 1]} : vector<256x384xf32> to vector<256x128xf32>
    %c0_3 = arith.constant 0 : index
    %c0_4 = arith.constant 0 : index
    %4 = vector.load %arg3[%c0_3, %c0_4] : memref<256x128xf32, #tpu.memory_space<vmem>>, vector<256x128xf32>
    tpu.vector_store %arg3[%c0_3, %c0_4], %3 {strides = array<i32>} : memref<256x128xf32, #tpu.memory_space<vmem>>, vector<256x128xf32>,
    %5 = vector.extract_strided_slice %2 {offsets = [0, 128], sizes = [256, 128], strides = [1, 1]} : vector<256x384xf32> to vector<256x128xf32>
    %c0_5 = arith.constant 0 : index
    %c0_6 = arith.constant 0 : index
    %6 = vector.load %arg4[%c0_5, %c0_6] : memref<256x128xf32, #tpu.memory_space<vmem>>, vector<256x128xf32>
    tpu.vector_store %arg4[%c0_5, %c0_6], %5 {strides = array<i32>} : memref<256x128xf32, #tpu.memory_space<vmem>>, vector<256x128xf32>,
    %7 = vector.extract_strided_slice %2 {offsets = [0, 256], sizes = [256, 128], strides = [1, 1]} : vector<256x384xf32> to vector<256x128xf32>
    %c0_7 = arith.constant 0 : index
    %c0_8 = arith.constant 0 : index
    %8 = vector.load %arg5[%c0_7, %c0_8] : memref<256x128xf32, #tpu.memory_space<vmem>>, vector<256x128xf32>
    tpu.vector_store %arg5[%c0_7, %c0_8], %7 {strides = array<i32>} : memref<256x128xf32, #tpu.memory_space<vmem>>, vector<256x128xf32>,
    return
  }
  func.func @transform_0(%arg0: i32) -> (i32, i32) {
    %c0_i32 = arith.constant 0 : i32
    %c0_i32_0 = arith.constant 0 : i32
    return %arg0, %c0_i32 : i32, i32
  }
  func.func @transform_1(%arg0: i32) -> (i32, i32) {
    %c0_i32 = arith.constant 0 : i32
    %c0_i32_0 = arith.constant 0 : i32
    %c0_i32_1 = arith.constant 0 : i32
    return %c0_i32, %c0_i32_0 : i32, i32
  }
  func.func @transform_2(%arg0: i32) -> (i32, i32) {
    %c0_i32 = arith.constant 0 : i32
    %c0_i32_0 = arith.constant 0 : i32
    return %arg0, %c0_i32 : i32, i32
  }
  func.func @transform_3(%arg0: i32) -> (i32, i32) {
    %c0_i32 = arith.constant 0 : i32
    %c0_i32_0 = arith.constant 0 : i32
    return %arg0, %c0_i32 : i32, i32
  }
  func.func @transform_4(%arg0: i32) -> (i32, i32) {
    %c0_i32 = arith.constant 0 : i32
    %c0_i32_0 = arith.constant 0 : i32
    return %arg0, %c0_i32 : i32, i32
  }
}

</mosaic_0001>

<llo_original>
// kernel: tpu_custom_call.1
$region0: #{tpu_custom_call.1}
  #allocation0 [shape = 'u32[]', space=smem, size = 0x4, offset = 0x4, fixed_abs, tag = 'smem constant byte address 0x4 - core index']
  #allocation1 [shape = 'u32[144,128]{1,0:T(1,128)}', space=vmem, size = 0x12000, scoped, tag = 'internal scratch']
  %s0 = inlined_call_operand.hbm [shape: f32[256,128], index: 0, kind: input, shape index: {}]
  %s1 = inlined_call_operand.hbm [shape: f32[128,384], index: 1, kind: input, shape index: {}]
  %s2 = inlined_call_operand.hbm [shape: f32[256,128], index: 2, kind: output, shape index: {0}]
  %s3 = inlined_call_operand.hbm [shape: f32[256,128], index: 3, kind: output, shape index: {1}]
  %s4 = inlined_call_operand.hbm [shape: f32[256,128], index: 4, kind: output, shape index: {2}]
  %5 = xla_tuple %s2, %s3, %s4
  %s6 = sld [smem:[#allocation0]]
  $region42: #{tpu_custom_call.1} parent=0
    _
  %s8 = ssub.s32 1, %s6
  %s9 = scalar_select 0, %s8, %s6
  $region1: #{tpu_custom_call.1} parent=0
    #allocation2 [shape = 'u8[131072]{0}', space=vmem, size = 0x20000, scoped, tag = 'input window, operand 0, single buffered']
    #allocation3 [shape = 's32[1]{0}', space=sflag, size = 0x4, scoped, tag = 'scoped memory for tpu_custom_call.1']
    #allocation4 [shape = 's32[1]{0}', space=sflag, size = 0x4, scoped, tag = 'scoped memory for tpu_custom_call.1']
    #allocation5 [shape = 'u8[196608]{0}', space=vmem, size = 0x30000, scoped, tag = 'input window, operand 1, single buffered']
    #allocation6 [shape = 's32[1]{0}', space=sflag, size = 0x4, scoped, tag = 'scoped memory for tpu_custom_call.1']
    #allocation7 [shape = 'u8[131072]{0}', space=vmem, size = 0x20000, scoped, tag = 'output window, operand 0, single buffered']
    #allocation8 [shape = 'u8[131072]{0}', space=vmem, size = 0x20000, scoped, tag = 'output window, operand 1, single buffered']
    #allocation9 [shape = 's32[1]{0}', space=sflag, size = 0x4, scoped, tag = 'scoped memory for tpu_custom_call.1']
    #allocation10 [shape = 'u8[131072]{0}', space=vmem, size = 0x20000, scoped, tag = 'output window, operand 2, single buffered']
    %10 = vsyncpa [#allocation3], 0
    %11 = vsyncpa [#allocation6], 0
    %12 = vsyncpa [#allocation4], 0
    %13 = vsyncpa [#allocation9], 0
    // Predicated region
    $region2: #{tpu_custom_call.1} parent=1 // pred_check
      _
    $region3: #{tpu_custom_call.1} parent=1 // pred_check_branch
      %15 = sbr.rel (0) target = $region5
    $region4: #{tpu_custom_call.1} parent=1 // pred_region
      %s17 = ssub.s32 4096, 4096
      %18 = vsyncadd [#allocation3], %s17
      %s19 = sshll.u32 [#allocation2], 4
      %s20 = int_to_ptr.vmem [resolvable:$true] %s19
      %25 = dma.hbm_to_vmem [thread:$0]  %s0, 4096, %s20, [#allocation3], 128, 128, 8
    $region5: #{tpu_custom_call.1} parent=1 // pred_fallthru
      _
    // Predicated region
    $region6: #{tpu_custom_call.1} parent=1 // pred_check
      _
    $region7: #{tpu_custom_call.1} parent=1 // pred_check_branch
      %27 = sbr.rel (0) target = $region9
    $region8: #{tpu_custom_call.1} parent=1 // pred_region
      %s29 = ssub.s32 6144, 6144
      %30 = vsyncadd [#allocation6], %s29
      %s31 = sshll.u32 [#allocation5], 4
      %s32 = int_to_ptr.vmem [resolvable:$true] %s31
      %37 = dma.hbm_to_vmem [thread:$0]  %s1, 6144, %s32, [#allocation6], 384, 384, 24
    $region9: #{tpu_custom_call.1} parent=1 // pred_fallthru
      _
    // Predicated region
    $region10: #{tpu_custom_call.1} parent=1 // pred_check
      _
    $region11: #{tpu_custom_call.1} parent=1 // pred_check_branch
      %39 = sbr.rel (0) target = $region13
    $region12: #{tpu_custom_call.1} parent=1 // pred_region
      %40 = dma.done [#allocation3], 4096
    $region13: #{tpu_custom_call.1} parent=1 // pred_fallthru
      _
    // Predicated region
    $region14: #{tpu_custom_call.1} parent=1 // pred_check
      _
    $region15: #{tpu_custom_call.1} parent=1 // pred_check_branch
      %42 = sbr.rel (0) target = $region17
    $region16: #{tpu_custom_call.1} parent=1 // pred_region
      %43 = dma.done [#allocation6], 6144
    $region17: #{tpu_custom_call.1} parent=1 // pred_fallthru
      _
    %v44 = vld [vmem:[#allocation2] sm:$0xff]
    %v45 = vld [vmem:[#allocation2 + $0x8] sm:$0xff]
    %v46 = vld [vmem:[#allocation2 + $0x10] sm:$0xff]
    %v47 = vld [vmem:[#allocation2 + $0x18] sm:$0xff]
    %v48 = vld [vmem:[#allocation2 + $0x20] sm:$0xff]
    %v49 = vld [vmem:[#allocation2 + $0x28] sm:$0xff]
    %v50 = vld [vmem:[#allocation2 + $0x30] sm:$0xff]
    %v51 = vld [vmem:[#allocation2 + $0x38] sm:$0xff]
    %v52 = vld [vmem:[#allocation2 + $0x40] sm:$0xff]
    %v53 = vld [vmem:[#allocation2 + $0x48] sm:$0xff]
    %v54 = vld [vmem:[#allocation2 + $0x50] sm:$0xff]
    %v55 = vld [vmem:[#allocation2 + $0x58] sm:$0xff]
    %v56 = vld [vmem:[#allocation2 + $0x60] sm:$0xff]
    %v57 = vld [vmem:[#allocation2 + $0x68] sm:$0xff]
    %v58 = vld [vmem:[#allocation2 + $0x70] sm:$0xff]
    %v59 = vld [vmem:[#allocation2 + $0x78] sm:$0xff]
    %v60 = vld [vmem:[#allocation2 + $0x80] sm:$0xff]
    %v61 = vld [vmem:[#allocation2 + $0x88] sm:$0xff]
    %v62 = vld [vmem:[#allocation2 + $0x90] sm:$0xff]
    %v63 = vld [vmem:[#allocation2 + $0x98] sm:$0xff]
    %v64 = vld [vmem:[#allocation2 + $0xa0] sm:$0xff]
    %v65 = vld [vmem:[#allocation2 + $0xa8] sm:$0xff]
    %v66 = vld [vmem:[#allocation2 + $0xb0] sm:$0xff]
    %v67 = vld [vmem:[#allocation2 + $0xb8] sm:$0xff]
    %v68 = vld [vmem:[#allocation2 + $0xc0] sm:$0xff]
    %v69 = vld [vmem:[#allocation2 + $0xc8] sm:$0xff]
    %v70 = vld [vmem:[#allocation2 + $0xd0] sm:$0xff]
    %v71 = vld [vmem:[#allocation2 + $0xd8] sm:$0xff]
    %v72 = vld [vmem:[#allocation2 + $0xe0] sm:$0xff]
    %v73 = vld [vmem:[#allocation2 + $0xe8] sm:$0xff]
    %v74 = vld [vmem:[#allocation2 + $0xf0] sm:$0xff]
    %v75 = vld [vmem:[#allocation2 + $0xf8] sm:$0xff]
    %v76 = vld [vmem:[#allocation5] sm:$0xff]
    %v77 = vld [vmem:[#allocation5 + $0x8] sm:$0xff]
    %v78 = vld [vmem:[#allocation5 + $0x10] sm:$0xff]
    %v79 = vld [vmem:[#allocation5 + $0x18] sm:$0xff]
    %v80 = vld [vmem:[#allocation5 + $0x20] sm:$0xff]
    %v81 = vld [vmem:[#allocation5 + $0x28] sm:$0xff]
    %v82 = vld [vmem:[#allocation5 + $0x30] sm:$0xff]
    %v83 = vld [vmem:[#allocation5 + $0x38] sm:$0xff]
    %v84 = vld [vmem:[#allocation5 + $0x40] sm:$0xff]
    %v85 = vld [vmem:[#allocation5 + $0x48] sm:$0xff]
    %v86 = vld [vmem:[#allocation5 + $0x50] sm:$0xff]
    %v87 = vld [vmem:[#allocation5 + $0x58] sm:$0xff]
    %v88 = vld [vmem:[#allocation5 + $0x60] sm:$0xff]
    %v89 = vld [vmem:[#allocation5 + $0x68] sm:$0xff]
    %v90 = vld [vmem:[#allocation5 + $0x70] sm:$0xff]
    %v91 = vld [vmem:[#allocation5 + $0x78] sm:$0xff]
    %v92 = vld [vmem:[#allocation5 + $0x80] sm:$0xff]
    %v93 = vld [vmem:[#allocation5 + $0x88] sm:$0xff]
    %v94 = vld [vmem:[#allocation5 + $0x90] sm:$0xff]
    %v95 = vld [vmem:[#allocation5 + $0x98] sm:$0xff]
    %v96 = vld [vmem:[#allocation5 + $0xa0] sm:$0xff]
    %v97 = vld [vmem:[#allocation5 + $0xa8] sm:$0xff]
    %v98 = vld [vmem:[#allocation5 + $0xb0] sm:$0xff]
    %v99 = vld [vmem:[#allocation5 + $0xb8] sm:$0xff]
    %v100 = vld [vmem:[#allocation5 + $0xc0] sm:$0xff]
    %v101 = vld [vmem:[#allocation5 + $0xc8] sm:$0xff]
    %v102 = vld [vmem:[#allocation5 + $0xd0] sm:$0xff]
    %v103 = vld [vmem:[#allocation5 + $0xd8] sm:$0xff]
    %v104 = vld [vmem:[#allocation5 + $0xe0] sm:$0xff]
    %v105 = vld [vmem:[#allocation5 + $0xe8] sm:$0xff]
    %v106 = vld [vmem:[#allocation5 + $0xf0] sm:$0xff]
    %v107 = vld [vmem:[#allocation5 + $0xf8] sm:$0xff]
    %v108 = vld [vmem:[#allocation5 + $0x100] sm:$0xff]
    %v109 = vld [vmem:[#allocation5 + $0x108] sm:$0xff]
    %v110 = vld [vmem:[#allocation5 + $0x110] sm:$0xff]
    %v111 = vld [vmem:[#allocation5 + $0x118] sm:$0xff]
    %v112 = vld [vmem:[#allocation5 + $0x120] sm:$0xff]
    %v113 = vld [vmem:[#allocation5 + $0x128] sm:$0xff]
    %v114 = vld [vmem:[#allocation5 + $0x130] sm:$0xff]
    %v115 = vld [vmem:[#allocation5 + $0x138] sm:$0xff]
    %v116 = vld [vmem:[#allocation5 + $0x140] sm:$0xff]
    %v117 = vld [vmem:[#allocation5 + $0x148] sm:$0xff]
    %v118 = vld [vmem:[#allocation5 + $0x150] sm:$0xff]
    %v119 = vld [vmem:[#allocation5 + $0x158] sm:$0xff]
    %v120 = vld [vmem:[#allocation5 + $0x160] sm:$0xff]
    %v121 = vld [vmem:[#allocation5 + $0x168] sm:$0xff]
    %v122 = vld [vmem:[#allocation5 + $0x170] sm:$0xff]
    %v123 = vld [vmem:[#allocation5 + $0x178] sm:$0xff]
    %124 = vmatprep.subr.mxu0 %v77
    %125 = vmatpush1.msra.mxu0 %v76
    %126 = vmatprep.subr.mxu0 %v80
    %127 = vmatpush1.msra.mxu0 %v79
    %128 = vmatprep.subr.mxu0 %v83
    %129 = vmatpush1.msra.mxu0 %v82
    %130 = vmatprep.subr.mxu0 %v86
    %131 = vmatpush1.msra.mxu0 %v85
    %132 = vmatprep.subr.mxu0 %v89
    %133 = vmatpush1.msra.mxu0 %v88
    %134 = vmatprep.subr.mxu0 %v92
    %135 = vmatpush1.msra.mxu0 %v91
    %136 = vmatprep.subr.mxu0 %v95
    %137 = vmatpush1.msra.mxu0 %v94
    %138 = vmatprep.subr.mxu0 %v98
    %139 = vmatpush1.msra.mxu0 %v97
    %140 = vmatprep.subr.mxu0 %v101
    %141 = vmatpush1.msra.mxu0 %v100
    %142 = vmatprep.subr.mxu0 %v104
    %143 = vmatpush1.msra.mxu0 %v103
    %144 = vmatprep.subr.mxu0 %v107
    %145 = vmatpush1.msra.mxu0 %v106
    %146 = vmatprep.subr.mxu0 %v110
    %147 = vmatpush1.msra.mxu0 %v109
    %148 = vmatprep.subr.mxu0 %v113
    %149 = vmatpush1.msra.mxu0 %v112
    %150 = vmatprep.subr.mxu0 %v116
    %151 = vmatpush1.msra.mxu0 %v115
    %152 = vmatprep.subr.mxu0 %v119
    %153 = vmatpush1.msra.mxu0 %v118
    %154 = vmatprep.subr.mxu0 %v122
    %155 = vmatpush1.msra.mxu0 %v121
    %156 = vmatprep.subr.mxu0 0.0
    %157 = vmatpush1.msra.mxu0 0.0
    %158 = vmatprep.subr.mxu0 0.0
    %159 = vmatpush1.msra.mxu0 0.0
    %160 = vmatprep.subr.mxu0 0.0
    %161 = vmatpush1.msra.mxu0 0.0
    %162 = vmatprep.subr.mxu0 0.0
    %163 = vmatpush1.msra.mxu0 0.0
    %164 = vmatprep.subr.mxu0 0.0
    %165 = vmatpush1.msra.mxu0 0.0
    %166 = vmatprep.subr.mxu0 0.0
    %167 = vmatpush1.msra.mxu0 0.0
    %168 = vmatprep.subr.mxu0 0.0
    %169 = vmatpush1.msra.mxu0 0.0
    %170 = vmatprep.subr.mxu0 0.0
    %171 = vmatpush1.msra.mxu0 0.0
    %172 = vmatprep.subr.mxu0 0.0
    %173 = vmatpush1.msra.mxu0 0.0
    %174 = vmatprep.subr.mxu0 0.0
    %175 = vmatpush1.msra.mxu0 0.0
    %176 = vmatprep.subr.mxu0 0.0
    %177 = vmatpush1.msra.mxu0 0.0
    %178 = vmatprep.subr.mxu0 0.0
    %179 = vmatpush1.msra.mxu0 0.0
    %180 = vmatprep.subr.mxu0 0.0
    %181 = vmatpush1.msra.mxu0 0.0
    %182 = vmatprep.subr.mxu0 0.0
    %183 = vmatpush1.msra.mxu0 0.0
    %184 = vmatprep.subr.mxu0 0.0
    %185 = vmatpush1.msra.mxu0 0.0
    %186 = vmatprep.subr.mxu0 0.0
    %187 = vmatpush1.msra.mxu0 0.0
    %188 = vmatprep.mubr.f32.mxu0 0.0
    %189 = vmatmul.mubr.f32.gmra.mrb[0].mxu0 %v44
    %v190 = vpop.f32.mrb[0].mxu0
    %v191 = vadd.f32 0.0, %v190
    %v192 = vpop.f32.mrb[0].mxu0
    %v193 = vadd.f32 0.0, %v192
    %194 = vmatprep.mubr.f32.mxu0 0.0
    %195 = vmatmul.mubr.f32.gmra.mrb[0].mxu0 %v45
    %v196 = vpop.f32.mrb[0].mxu0
    %v197 = vadd.f32 0.0, %v196
    %v198 = vpop.f32.mrb[0].mxu0
    %v199 = vadd.f32 0.0, %v198
    %200 = vmatprep.mubr.f32.mxu0 0.0
    %201 = vmatmul.mubr.f32.gmra.mrb[0].mxu0 %v46
    %v202 = vpop.f32.mrb[0].mxu0
    %v203 = vadd.f32 0.0, %v202
    %v204 = vpop.f32.mrb[0].mxu0
    %v205 = vadd.f32 0.0, %v204
    %206 = vmatprep.mubr.f32.mxu0 0.0
    %207 = vmatmul.mubr.f32.gmra.mrb[0].mxu0 %v47
    %v208 = vpop.f32.mrb[0].mxu0
    %v209 = vadd.f32 0.0, %v208
    %v210 = vpop.f32.mrb[0].mxu0
    %v211 = vadd.f32 0.0, %v210
    %212 = vmatprep.mubr.f32.mxu0 0.0
    %213 = vmatmul.mubr.f32.gmra.mrb[0].mxu0 %v48
    %v214 = vpop.f32.mrb[0].mxu0
    %v215 = vadd.f32 0.0, %v214
    %v216 = vpop.f32.mrb[0].mxu0
    %v217 = vadd.f32 0.0, %v216
    %218 = vmatprep.mubr.f32.mxu0 0.0
    %219 = vmatmul.mubr.f32.gmra.mrb[0].mxu0 %v49
    %v220 = vpop.f32.mrb[0].mxu0
    %v221 = vadd.f32 0.0, %v220
    %v222 = vpop.f32.mrb[0].mxu0
    %v223 = vadd.f32 0.0, %v222
    %224 = vmatprep.mubr.f32.mxu0 0.0
    %225 = vmatmul.mubr.f32.gmra.mrb[0].mxu0 %v50
    %v226 = vpop.f32.mrb[0].mxu0
    %v227 = vadd.f32 0.0, %v226
    %v228 = vpop.f32.mrb[0].mxu0
    %v229 = vadd.f32 0.0, %v228
    %230 = vmatprep.mubr.f32.mxu0 0.0
    %231 = vmatmul.mubr.f32.gmra.mrb[0].mxu0 %v51
    %v232 = vpop.f32.mrb[0].mxu0
    %v233 = vadd.f32 0.0, %v232
    %v234 = vpop.f32.mrb[0].mxu0
    %v235 = vadd.f32 0.0, %v234
    %236 = vmatprep.mubr.f32.mxu0 0.0
    %237 = vmatmul.mubr.f32.gmra.mrb[0].mxu0 %v52
    %v238 = vpop.f32.mrb[0].mxu0
    %v239 = vadd.f32 0.0, %v238
    %v240 = vpop.f32.mrb[0].mxu0
    %v241 = vadd.f32 0.0, %v240
    %242 = vmatprep.mubr.f32.mxu0 0.0
    %243 = vmatmul.mubr.f32.gmra.mrb[0].mxu0 %v53
    %v244 = vpop.f32.mrb[0].mxu0
    %v245 = vadd.f32 0.0, %v244
    %v246 = vpop.f32.mrb[0].mxu0
    %v247 = vadd.f32 0.0, %v246
    %248 = vmatprep.mubr.f32.mxu0 0.0
    %249 = vmatmul.mubr.f32.gmra.mrb[0].mxu0 %v54
    %v250 = vpop.f32.mrb[0].mxu0
    %v251 = vadd.f32 0.0, %v250
    %v252 = vpop.f32.mrb[0].mxu0
    %v253 = vadd.f32 0.0, %v252
    %254 = vmatprep.mubr.f32.mxu0 0.0
    %255 = vmatmul.mubr.f32.gmra.mrb[0].mxu0 %v55
    %v256 = vpop.f32.mrb[0].mxu0
    %v257 = vadd.f32 0.0, %v256
    %v258 = vpop.f32.mrb[0].mxu0
    %v259 = vadd.f32 0.0, %v258
    %260 = vmatprep.mubr.f32.mxu0 0.0
    %261 = vmatmul.mubr.f32.gmra.mrb[0].mxu0 %v56
    %v262 = vpop.f32.mrb[0].mxu0
    %v263 = vadd.f32 0.0, %v262
    %v264 = vpop.f32.mrb[0].mxu0
    %v265 = vadd.f32 0.0, %v264
    %266 = vmatprep.mubr.f32.mxu0 0.0
    %267 = vmatmul.mubr.f32.gmra.mrb[0].mxu0 %v57
    %v268 = vpop.f32.mrb[0].mxu0
    %v269 = vadd.f32 0.0, %v268
    %v270 = vpop.f32.mrb[0].mxu0
    %v271 = vadd.f32 0.0, %v270
    %272 = vmatprep.mubr.f32.mxu0 0.0
    %273 = vmatmul.mubr.f32.gmra.mrb[0].mxu0 %v58
    %v274 = vpop.f32.mrb[0].mxu0
    %v275 = vadd.f32 0.0, %v274
    %v276 = vpop.f32.mrb[0].mxu0
    %v277 = vadd.f32 0.0, %v276
    %278 = vmatprep.mubr.f32.mxu0 0.0
    %279 = vmatmul.mubr.f32.gmra.mrb[0].mxu0 %v59
    %v280 = vpop.f32.mrb[0].mxu0
    %v281 = vadd.f32 0.0, %v280
    %v282 = vpop.f32.mrb[0].mxu0
    %v283 = vadd.f32 0.0, %v282
    %284 = vmatprep.mubr.f32.mxu0 0.0
    %285 = vmatmul.mubr.f32.gmra.mrb[0].mxu0 %v60
    %v286 = vpop.f32.mrb[0].mxu0
    %v287 = vadd.f32 0.0, %v286
    %v288 = vpop.f32.mrb[0].mxu0
    %v289 = vadd.f32 0.0, %v288
    %290 = vmatprep.mubr.f32.mxu0 0.0
    %291 = vmatmul.mubr.f32.gmra.mrb[0].mxu0 %v61
    %v292 = vpop.f32.mrb[0].mxu0
    %v293 = vadd.f32 0.0, %v292
    %v294 = vpop.f32.mrb[0].mxu0
    %v295 = vadd.f32 0.0, %v294
    %296 = vmatprep.mubr.f32.mxu0 0.0
    %297 = vmatmul.mubr.f32.gmra.mrb[0].mxu0 %v62
    %v298 = vpop.f32.mrb[0].mxu0
    %v299 = vadd.f32 0.0, %v298
    %v300 = vpop.f32.mrb[0].mxu0
    %v301 = vadd.f32 0.0, %v300
    %302 = vmatprep.mubr.f32.mxu0 0.0
    %303 = vmatmul.mubr.f32.gmra.mrb[0].mxu0 %v63
    %v304 = vpop.f32.mrb[0].mxu0
    %v305 = vadd.f32 0.0, %v304
    %v306 = vpop.f32.mrb[0].mxu0
    %v307 = vadd.f32 0.0, %v306
    %308 = vmatprep.mubr.f32.mxu0 0.0
    %309 = vmatmul.mubr.f32.gmra.mrb[0].mxu0 %v64
    %v310 = vpop.f32.mrb[0].mxu0
    %v311 = vadd.f32 0.0, %v310
    %v312 = vpop.f32.mrb[0].mxu0
    %v313 = vadd.f32 0.0, %v312
    %314 = vmatprep.mubr.f32.mxu0 0.0
    %315 = vmatmul.mubr.f32.gmra.mrb[0].mxu0 %v65
    %v316 = vpop.f32.mrb[0].mxu0
    %v317 = vadd.f32 0.0, %v316
    %v318 = vpop.f32.mrb[0].mxu0
    %v319 = vadd.f32 0.0, %v318
    %320 = vmatprep.mubr.f32.mxu0 0.0
    %321 = vmatmul.mubr.f32.gmra.mrb[0].mxu0 %v66
    %v322 = vpop.f32.mrb[0].mxu0
    %v323 = vadd.f32 0.0, %v322
    %v324 = vpop.f32.mrb[0].mxu0
    %v325 = vadd.f32 0.0, %v324
    %326 = vmatprep.mubr.f32.mxu0 0.0
    %327 = vmatmul.mubr.f32.gmra.mrb[0].mxu0 %v67
    %v328 = vpop.f32.mrb[0].mxu0
    %v329 = vadd.f32 0.0, %v328
    %v330 = vpop.f32.mrb[0].mxu0
    %v331 = vadd.f32 0.0, %v330
    %332 = vmatprep.mubr.f32.mxu0 0.0
    %333 = vmatmul.mubr.f32.gmra.mrb[0].mxu0 %v68
    %v334 = vpop.f32.mrb[0].mxu0
    %v335 = vadd.f32 0.0, %v334
    %v336 = vpop.f32.mrb[0].mxu0
    %v337 = vadd.f32 0.0, %v336
    %338 = vmatprep.mubr.f32.mxu0 0.0
    %339 = vmatmul.mubr.f32.gmra.mrb[0].mxu0 %v69
    %v340 = vpop.f32.mrb[0].mxu0
    %v341 = vadd.f32 0.0, %v340
    %v342 = vpop.f32.mrb[0].mxu0
    %v343 = vadd.f32 0.0, %v342
    %344 = vmatprep.mubr.f32.mxu0 0.0
    %345 = vmatmul.mubr.f32.gmra.mrb[0].mxu0 %v70
    %v346 = vpop.f32.mrb[0].mxu0
    %v347 = vadd.f32 0.0, %v346
    %v348 = vpop.f32.mrb[0].mxu0
    %v349 = vadd.f32 0.0, %v348
    %350 = vmatprep.mubr.f32.mxu0 0.0
    %351 = vmatmul.mubr.f32.gmra.mrb[0].mxu0 %v71
    %v352 = vpop.f32.mrb[0].mxu0
    %v353 = vadd.f32 0.0, %v352
    %v354 = vpop.f32.mrb[0].mxu0
    %v355 = vadd.f32 0.0, %v354
    %356 = vmatprep.mubr.f32.mxu0 0.0
    %357 = vmatmul.mubr.f32.gmra.mrb[0].mxu0 %v72
    %v358 = vpop.f32.mrb[0].mxu0
    %v359 = vadd.f32 0.0, %v358
    %v360 = vpop.f32.mrb[0].mxu0
    %v361 = vadd.f32 0.0, %v360
    %362 = vmatprep.mubr.f32.mxu0 0.0
    %363 = vmatmul.mubr.f32.gmra.mrb[0].mxu0 %v73
    %v364 = vpop.f32.mrb[0].mxu0
    %v365 = vadd.f32 0.0, %v364
    %v366 = vpop.f32.mrb[0].mxu0
    %v367 = vadd.f32 0.0, %v366
    %368 = vmatprep.mubr.f32.mxu0 0.0
    %369 = vmatmul.mubr.f32.gmra.mrb[0].mxu0 %v74
    %v370 = vpop.f32.mrb[0].mxu0
    %v371 = vadd.f32 0.0, %v370
    %v372 = vpop.f32.mrb[0].mxu0
    %v373 = vadd.f32 0.0, %v372
    %374 = vmatprep.mubr.f32.mxu0 0.0
    %375 = vmatmul.mubr.f32.gmra.mrb[0].mxu0 %v75
    %v376 = vpop.f32.mrb[0].mxu0
    %v377 = vadd.f32 0.0, %v376
    %v378 = vpop.f32.mrb[0].mxu0
    %v379 = vadd.f32 0.0, %v378
    %380 = vdwg.mxu0
    %381 = vmatprep.subr.mxu0 0.0
    %382 = vmatpush1.msra.mxu0 %v78
    %383 = vmatprep.subr.mxu0 0.0
    %384 = vmatpush1.msra.mxu0 %v81
    %385 = vmatprep.subr.mxu0 0.0
    %386 = vmatpush1.msra.mxu0 %v84
    %387 = vmatprep.subr.mxu0 0.0
    %388 = vmatpush1.msra.mxu0 %v87
    %389 = vmatprep.subr.mxu0 0.0
    %390 = vmatpush1.msra.mxu0 %v90
    %391 = vmatprep.subr.mxu0 0.0
    %392 = vmatpush1.msra.mxu0 %v93
    %393 = vmatprep.subr.mxu0 0.0
    %394 = vmatpush1.msra.mxu0 %v96
    %395 = vmatprep.subr.mxu0 0.0
    %396 = vmatpush1.msra.mxu0 %v99
    %397 = vmatprep.subr.mxu0 0.0
    %398 = vmatpush1.msra.mxu0 %v102
    %399 = vmatprep.subr.mxu0 0.0
    %400 = vmatpush1.msra.mxu0 %v105
    %401 = vmatprep.subr.mxu0 0.0
    %402 = vmatpush1.msra.mxu0 %v108
    %403 = vmatprep.subr.mxu0 0.0
    %404 = vmatpush1.msra.mxu0 %v111
    %405 = vmatprep.subr.mxu0 0.0
    %406 = vmatpush1.msra.mxu0 %v114
    %407 = vmatprep.subr.mxu0 0.0
    %408 = vmatpush1.msra.mxu0 %v117
    %409 = vmatprep.subr.mxu0 0.0
    %410 = vmatpush1.msra.mxu0 %v120
    %411 = vmatprep.subr.mxu0 0.0
    %412 = vmatpush1.msra.mxu0 %v123
    %413 = vmatprep.subr.mxu0 0.0
    %414 = vmatpush1.msra.mxu0 0.0
    %415 = vmatprep.subr.mxu0 0.0
    %416 = vmatpush1.msra.mxu0 0.0
    %417 = vmatprep.subr.mxu0 0.0
    %418 = vmatpush1.msra.mxu0 0.0
    %419 = vmatprep.subr.mxu0 0.0
    %420 = vmatpush1.msra.mxu0 0.0
    %421 = vmatprep.subr.mxu0 0.0
    %422 = vmatpush1.msra.mxu0 0.0
    %423 = vmatprep.subr.mxu0 0.0
    %424 = vmatpush1.msra.mxu0 0.0
    %425 = vmatprep.subr.mxu0 0.0
    %426 = vmatpush1.msra.mxu0 0.0
    %427 = vmatprep.subr.mxu0 0.0
    %428 = vmatpush1.msra.mxu0 0.0
    %429 = vmatprep.subr.mxu0 0.0
    %430 = vmatpush1.msra.mxu0 0.0
    %431 = vmatprep.subr.mxu0 0.0
    %432 = vmatpush1.msra.mxu0 0.0
    %433 = vmatprep.subr.mxu0 0.0
    %434 = vmatpush1.msra.mxu0 0.0
    %435 = vmatprep.subr.mxu0 0.0
    %436 = vmatpush1.msra.mxu0 0.0
    %437 = vmatprep.subr.mxu0 0.0
    %438 = vmatpush1.msra.mxu0 0.0
    %439 = vmatprep.subr.mxu0 0.0
    %440 = vmatpush1.msra.mxu0 0.0
    %441 = vmatprep.subr.mxu0 0.0
    %442 = vmatpush1.msra.mxu0 0.0
    %443 = vmatprep.subr.mxu0 0.0
    %444 = vmatpush1.msra.mxu0 0.0
    %445 = vmatprep.mubr.f32.mxu0 0.0
    %446 = vmatmul.mubr.f32.gmra.mrb[0].mxu0 %v44
    %v447 = vpop.f32.mrb[0].mxu0
    %v448 = vadd.f32 0.0, %v447
    %v449 = vpop.f32.mrb[0].mxu0
    %450 = vmatprep.mubr.f32.mxu0 0.0
    %451 = vmatmul.mubr.f32.gmra.mrb[0].mxu0 %v45
    %v452 = vpop.f32.mrb[0].mxu0
    %v453 = vadd.f32 0.0, %v452
    %v454 = vpop.f32.mrb[0].mxu0
    %455 = vmatprep.mubr.f32.mxu0 0.0
    %456 = vmatmul.mubr.f32.gmra.mrb[0].mxu0 %v46
    %v457 = vpop.f32.mrb[0].mxu0
    %v458 = vadd.f32 0.0, %v457
    %v459 = vpop.f32.mrb[0].mxu0
    %460 = vmatprep.mubr.f32.mxu0 0.0
    %461 = vmatmul.mubr.f32.gmra.mrb[0].mxu0 %v47
    %v462 = vpop.f32.mrb[0].mxu0
    %v463 = vadd.f32 0.0, %v462
    %v464 = vpop.f32.mrb[0].mxu0
    %465 = vmatprep.mubr.f32.mxu0 0.0
    %466 = vmatmul.mubr.f32.gmra.mrb[0].mxu0 %v48
    %v467 = vpop.f32.mrb[0].mxu0
    %v468 = vadd.f32 0.0, %v467
    %v469 = vpop.f32.mrb[0].mxu0
    %470 = vmatprep.mubr.f32.mxu0 0.0
    %471 = vmatmul.mubr.f32.gmra.mrb[0].mxu0 %v49
    %v472 = vpop.f32.mrb[0].mxu0
    %v473 = vadd.f32 0.0, %v472
    %v474 = vpop.f32.mrb[0].mxu0
    %475 = vmatprep.mubr.f32.mxu0 0.0
    %476 = vmatmul.mubr.f32.gmra.mrb[0].mxu0 %v50
    %v477 = vpop.f32.mrb[0].mxu0
    %v478 = vadd.f32 0.0, %v477
    %v479 = vpop.f32.mrb[0].mxu0
    %480 = vmatprep.mubr.f32.mxu0 0.0
    %481 = vmatmul.mubr.f32.gmra.mrb[0].mxu0 %v51
    %v482 = vpop.f32.mrb[0].mxu0
    %v483 = vadd.f32 0.0, %v482
    %v484 = vpop.f32.mrb[0].mxu0
    %485 = vmatprep.mubr.f32.mxu0 0.0
    %486 = vmatmul.mubr.f32.gmra.mrb[0].mxu0 %v52
    %v487 = vpop.f32.mrb[0].mxu0
    %v488 = vadd.f32 0.0, %v487
    %v489 = vpop.f32.mrb[0].mxu0
    %490 = vmatprep.mubr.f32.mxu0 0.0
    %491 = vmatmul.mubr.f32.gmra.mrb[0].mxu0 %v53
    %v492 = vpop.f32.mrb[0].mxu0
    %v493 = vadd.f32 0.0, %v492
    %v494 = vpop.f32.mrb[0].mxu0
    %495 = vmatprep.mubr.f32.mxu0 0.0
    %496 = vmatmul.mubr.f32.gmra.mrb[0].mxu0 %v54
    %v497 = vpop.f32.mrb[0].mxu0
    %v498 = vadd.f32 0.0, %v497
    %v499 = vpop.f32.mrb[0].mxu0
    %500 = vmatprep.mubr.f32.mxu0 0.0
    %501 = vmatmul.mubr.f32.gmra.mrb[0].mxu0 %v55
    %v502 = vpop.f32.mrb[0].mxu0
    %v503 = vadd.f32 0.0, %v502
    %v504 = vpop.f32.mrb[0].mxu0
    %505 = vmatprep.mubr.f32.mxu0 0.0
    %506 = vmatmul.mubr.f32.gmra.mrb[0].mxu0 %v56
    %v507 = vpop.f32.mrb[0].mxu0
    %v508 = vadd.f32 0.0, %v507
    %v509 = vpop.f32.mrb[0].mxu0
    %510 = vmatprep.mubr.f32.mxu0 0.0
    %511 = vmatmul.mubr.f32.gmra.mrb[0].mxu0 %v57
    %v512 = vpop.f32.mrb[0].mxu0
    %v513 = vadd.f32 0.0, %v512
    %v514 = vpop.f32.mrb[0].mxu0
    %515 = vmatprep.mubr.f32.mxu0 0.0
    %516 = vmatmul.mubr.f32.gmra.mrb[0].mxu0 %v58
    %v517 = vpop.f32.mrb[0].mxu0
    %v518 = vadd.f32 0.0, %v517
    %v519 = vpop.f32.mrb[0].mxu0
    %520 = vmatprep.mubr.f32.mxu0 0.0
    %521 = vmatmul.mubr.f32.gmra.mrb[0].mxu0 %v59
    %v522 = vpop.f32.mrb[0].mxu0
    %v523 = vadd.f32 0.0, %v522
    %v524 = vpop.f32.mrb[0].mxu0
    %525 = vmatprep.mubr.f32.mxu0 0.0
    %526 = vmatmul.mubr.f32.gmra.mrb[0].mxu0 %v60
    %v527 = vpop.f32.mrb[0].mxu0
    %v528 = vadd.f32 0.0, %v527
    %v529 = vpop.f32.mrb[0].mxu0
    %530 = vmatprep.mubr.f32.mxu0 0.0
    %531 = vmatmul.mubr.f32.gmra.mrb[0].mxu0 %v61
    %v532 = vpop.f32.mrb[0].mxu0
    %v533 = vadd.f32 0.0, %v532
    %v534 = vpop.f32.mrb[0].mxu0
    %535 = vmatprep.mubr.f32.mxu0 0.0
    %536 = vmatmul.mubr.f32.gmra.mrb[0].mxu0 %v62
    %v537 = vpop.f32.mrb[0].mxu0
    %v538 = vadd.f32 0.0, %v537
    %v539 = vpop.f32.mrb[0].mxu0
    %540 = vmatprep.mubr.f32.mxu0 0.0
    %541 = vmatmul.mubr.f32.gmra.mrb[0].mxu0 %v63
    %v542 = vpop.f32.mrb[0].mxu0
    %v543 = vadd.f32 0.0, %v542
    %v544 = vpop.f32.mrb[0].mxu0
    %545 = vmatprep.mubr.f32.mxu0 0.0
    %546 = vmatmul.mubr.f32.gmra.mrb[0].mxu0 %v64
    %v547 = vpop.f32.mrb[0].mxu0
    %v548 = vadd.f32 0.0, %v547
    %v549 = vpop.f32.mrb[0].mxu0
    %550 = vmatprep.mubr.f32.mxu0 0.0
    %551 = vmatmul.mubr.f32.gmra.mrb[0].mxu0 %v65
    %v552 = vpop.f32.mrb[0].mxu0
    %v553 = vadd.f32 0.0, %v552
    %v554 = vpop.f32.mrb[0].mxu0
    %555 = vmatprep.mubr.f32.mxu0 0.0
    %556 = vmatmul.mubr.f32.gmra.mrb[0].mxu0 %v66
    %v557 = vpop.f32.mrb[0].mxu0
    %v558 = vadd.f32 0.0, %v557
    %v559 = vpop.f32.mrb[0].mxu0
    %560 = vmatprep.mubr.f32.mxu0 0.0
    %561 = vmatmul.mubr.f32.gmra.mrb[0].mxu0 %v67
    %v562 = vpop.f32.mrb[0].mxu0
    %v563 = vadd.f32 0.0, %v562
    %v564 = vpop.f32.mrb[0].mxu0
    %565 = vmatprep.mubr.f32.mxu0 0.0
    %566 = vmatmul.mubr.f32.gmra.mrb[0].mxu0 %v68
    %v567 = vpop.f32.mrb[0].mxu0
    %v568 = vadd.f32 0.0, %v567
    %v569 = vpop.f32.mrb[0].mxu0
    %570 = vmatprep.mubr.f32.mxu0 0.0
    %571 = vmatmul.mubr.f32.gmra.mrb[0].mxu0 %v69
    %v572 = vpop.f32.mrb[0].mxu0
    %v573 = vadd.f32 0.0, %v572
    %v574 = vpop.f32.mrb[0].mxu0
    %575 = vmatprep.mubr.f32.mxu0 0.0
    %576 = vmatmul.mubr.f32.gmra.mrb[0].mxu0 %v70
    %v577 = vpop.f32.mrb[0].mxu0
    %v578 = vadd.f32 0.0, %v577
    %v579 = vpop.f32.mrb[0].mxu0
    %580 = vmatprep.mubr.f32.mxu0 0.0
    %581 = vmatmul.mubr.f32.gmra.mrb[0].mxu0 %v71
    %v582 = vpop.f32.mrb[0].mxu0
    %v583 = vadd.f32 0.0, %v582
    %v584 = vpop.f32.mrb[0].mxu0
    %585 = vmatprep.mubr.f32.mxu0 0.0
    %586 = vmatmul.mubr.f32.gmra.mrb[0].mxu0 %v72
    %v587 = vpop.f32.mrb[0].mxu0
    %v588 = vadd.f32 0.0, %v587
    %v589 = vpop.f32.mrb[0].mxu0
    %590 = vmatprep.mubr.f32.mxu0 0.0
    %591 = vmatmul.mubr.f32.gmra.mrb[0].mxu0 %v73
    %v592 = vpop.f32.mrb[0].mxu0
    %v593 = vadd.f32 0.0, %v592
    %v594 = vpop.f32.mrb[0].mxu0
    %595 = vmatprep.mubr.f32.mxu0 0.0
    %596 = vmatmul.mubr.f32.gmra.mrb[0].mxu0 %v74
    %v597 = vpop.f32.mrb[0].mxu0
    %v598 = vadd.f32 0.0, %v597
    %v599 = vpop.f32.mrb[0].mxu0
    %600 = vmatprep.mubr.f32.mxu0 0.0
    %601 = vmatmul.mubr.f32.gmra.mrb[0].mxu0 %v75
    %v602 = vpop.f32.mrb[0].mxu0
    %v603 = vadd.f32 0.0, %v602
    %v604 = vpop.f32.mrb[0].mxu0
    %605 = vdwg.mxu0
    %606 = vst [vmem:[#allocation7] sm:$0xff] %v191
    %607 = vst [vmem:[#allocation7 + $0x8] sm:$0xff] %v197
    %608 = vst [vmem:[#allocation7 + $0x10] sm:$0xff] %v203
    %609 = vst [vmem:[#allocation7 + $0x18] sm:$0xff] %v209
    %610 = vst [vmem:[#allocation7 + $0x20] sm:$0xff] %v215
    %611 = vst [vmem:[#allocation7 + $0x28] sm:$0xff] %v221
    %612 = vst [vmem:[#allocation7 + $0x30] sm:$0xff] %v227
    %613 = vst [vmem:[#allocation7 + $0x38] sm:$0xff] %v233
    %614 = vst [vmem:[#allocation7 + $0x40] sm:$0xff] %v239
    %615 = vst [vmem:[#allocation7 + $0x48] sm:$0xff] %v245
    %616 = vst [vmem:[#allocation7 + $0x50] sm:$0xff] %v251
    %617 = vst [vmem:[#allocation7 + $0x58] sm:$0xff] %v257
    %618 = vst [vmem:[#allocation7 + $0x60] sm:$0xff] %v263
    %619 = vst [vmem:[#allocation7 + $0x68] sm:$0xff] %v269
    %620 = vst [vmem:[#allocation7 + $0x70] sm:$0xff] %v275
    %621 = vst [vmem:[#allocation7 + $0x78] sm:$0xff] %v281
    %622 = vst [vmem:[#allocation7 + $0x80] sm:$0xff] %v287
    %623 = vst [vmem:[#allocation7 + $0x88] sm:$0xff] %v293
    %624 = vst [vmem:[#allocation7 + $0x90] sm:$0xff] %v299
    %625 = vst [vmem:[#allocation7 + $0x98] sm:$0xff] %v305
    %626 = vst [vmem:[#allocation7 + $0xa0] sm:$0xff] %v311
    %627 = vst [vmem:[#allocation7 + $0xa8] sm:$0xff] %v317
    %628 = vst [vmem:[#allocation7 + $0xb0] sm:$0xff] %v323
    %629 = vst [vmem:[#allocation7 + $0xb8] sm:$0xff] %v329
    %630 = vst [vmem:[#allocation7 + $0xc0] sm:$0xff] %v335
    %631 = vst [vmem:[#allocation7 + $0xc8] sm:$0xff] %v341
    %632 = vst [vmem:[#allocation7 + $0xd0] sm:$0xff] %v347
    %633 = vst [vmem:[#allocation7 + $0xd8] sm:$0xff] %v353
    %634 = vst [vmem:[#allocation7 + $0xe0] sm:$0xff] %v359
    %635 = vst [vmem:[#allocation7 + $0xe8] sm:$0xff] %v365
    %636 = vst [vmem:[#allocation7 + $0xf0] sm:$0xff] %v371
    %637 = vst [vmem:[#allocation7 + $0xf8] sm:$0xff] %v377
    %638 = vst [vmem:[#allocation8] sm:$0xff] %v193
    %639 = vst [vmem:[#allocation8 + $0x8] sm:$0xff] %v199
    %640 = vst [vmem:[#allocation8 + $0x10] sm:$0xff] %v205
    %641 = vst [vmem:[#allocation8 + $0x18] sm:$0xff] %v211
    %642 = vst [vmem:[#allocation8 + $0x20] sm:$0xff] %v217
    %643 = vst [vmem:[#allocation8 + $0x28] sm:$0xff] %v223
    %644 = vst [vmem:[#allocation8 + $0x30] sm:$0xff] %v229
    %645 = vst [vmem:[#allocation8 + $0x38] sm:$0xff] %v235
    %646 = vst [vmem:[#allocation8 + $0x40] sm:$0xff] %v241
    %647 = vst [vmem:[#allocation8 + $0x48] sm:$0xff] %v247
    %648 = vst [vmem:[#allocation8 + $0x50] sm:$0xff] %v253
    %649 = vst [vmem:[#allocation8 + $0x58] sm:$0xff] %v259
    %650 = vst [vmem:[#allocation8 + $0x60] sm:$0xff] %v265
    %651 = vst [vmem:[#allocation8 + $0x68] sm:$0xff] %v271
    %652 = vst [vmem:[#allocation8 + $0x70] sm:$0xff] %v277
    %653 = vst [vmem:[#allocation8 + $0x78] sm:$0xff] %v283
    %654 = vst [vmem:[#allocation8 + $0x80] sm:$0xff] %v289
    %655 = vst [vmem:[#allocation8 + $0x88] sm:$0xff] %v295
    %656 = vst [vmem:[#allocation8 + $0x90] sm:$0xff] %v301
    %657 = vst [vmem:[#allocation8 + $0x98] sm:$0xff] %v307
    %658 = vst [vmem:[#allocation8 + $0xa0] sm:$0xff] %v313
    %659 = vst [vmem:[#allocation8 + $0xa8] sm:$0xff] %v319
    %660 = vst [vmem:[#allocation8 + $0xb0] sm:$0xff] %v325
    %661 = vst [vmem:[#allocation8 + $0xb8] sm:$0xff] %v331
    %662 = vst [vmem:[#allocation8 + $0xc0] sm:$0xff] %v337
    %663 = vst [vmem:[#allocation8 + $0xc8] sm:$0xff] %v343
    %664 = vst [vmem:[#allocation8 + $0xd0] sm:$0xff] %v349
    %665 = vst [vmem:[#allocation8 + $0xd8] sm:$0xff] %v355
    %666 = vst [vmem:[#allocation8 + $0xe0] sm:$0xff] %v361
    %667 = vst [vmem:[#allocation8 + $0xe8] sm:$0xff] %v367
    %668 = vst [vmem:[#allocation8 + $0xf0] sm:$0xff] %v373
    %669 = vst [vmem:[#allocation8 + $0xf8] sm:$0xff] %v379
    %670 = vst [vmem:[#allocation10] sm:$0xff] %v448
    %671 = vst [vmem:[#allocation10 + $0x8] sm:$0xff] %v453
    %672 = vst [vmem:[#allocation10 + $0x10] sm:$0xff] %v458
    %673 = vst [vmem:[#allocation10 + $0x18] sm:$0xff] %v463
    %674 = vst [vmem:[#allocation10 + $0x20] sm:$0xff] %v468
    %675 = vst [vmem:[#allocation10 + $0x28] sm:$0xff] %v473
    %676 = vst [vmem:[#allocation10 + $0x30] sm:$0xff] %v478
    %677 = vst [vmem:[#allocation10 + $0x38] sm:$0xff] %v483
    %678 = vst [vmem:[#allocation10 + $0x40] sm:$0xff] %v488
    %679 = vst [vmem:[#allocation10 + $0x48] sm:$0xff] %v493
    %680 = vst [vmem:[#allocation10 + $0x50] sm:$0xff] %v498
    %681 = vst [vmem:[#allocation10 + $0x58] sm:$0xff] %v503
    %682 = vst [vmem:[#allocation10 + $0x60] sm:$0xff] %v508
    %683 = vst [vmem:[#allocation10 + $0x68] sm:$0xff] %v513
    %684 = vst [vmem:[#allocation10 + $0x70] sm:$0xff] %v518
    %685 = vst [vmem:[#allocation10 + $0x78] sm:$0xff] %v523
    %686 = vst [vmem:[#allocation10 + $0x80] sm:$0xff] %v528
    %687 = vst [vmem:[#allocation10 + $0x88] sm:$0xff] %v533
    %688 = vst [vmem:[#allocation10 + $0x90] sm:$0xff] %v538
    %689 = vst [vmem:[#allocation10 + $0x98] sm:$0xff] %v543
    %690 = vst [vmem:[#allocation10 + $0xa0] sm:$0xff] %v548
    %691 = vst [vmem:[#allocation10 + $0xa8] sm:$0xff] %v553
    %692 = vst [vmem:[#allocation10 + $0xb0] sm:$0xff] %v558
    %693 = vst [vmem:[#allocation10 + $0xb8] sm:$0xff] %v563
    %694 = vst [vmem:[#allocation10 + $0xc0] sm:$0xff] %v568
    %695 = vst [vmem:[#allocation10 + $0xc8] sm:$0xff] %v573
    %696 = vst [vmem:[#allocation10 + $0xd0] sm:$0xff] %v578
    %697 = vst [vmem:[#allocation10 + $0xd8] sm:$0xff] %v583
    %698 = vst [vmem:[#allocation10 + $0xe0] sm:$0xff] %v588
    %699 = vst [vmem:[#allocation10 + $0xe8] sm:$0xff] %v593
    %700 = vst [vmem:[#allocation10 + $0xf0] sm:$0xff] %v598
    %701 = vst [vmem:[#allocation10 + $0xf8] sm:$0xff] %v603
    // Predicated region
    $region18: #{tpu_custom_call.1} parent=1 // pred_check
      _
    $region19: #{tpu_custom_call.1} parent=1 // pred_check_branch
      %703 = sbr.rel (0) target = $region21
    $region20: #{tpu_custom_call.1} parent=1 // pred_region
      %s705 = ssub.s32 4096, 4096
      %706 = vsyncadd [#allocation4], %s705
      %s707 = sshll.u32 [#allocation7], 4
      %s708 = int_to_ptr.vmem [resolvable:$true] %s707
      %713 = dma.vmem_to_hbm [thread:$0]  %s708, 4096, %s2, [#allocation4], 128, 128, 8
    $region21: #{tpu_custom_call.1} parent=1 // pred_fallthru
      _
    // Predicated region
    $region22: #{tpu_custom_call.1} parent=1 // pred_check
      _
    $region23: #{tpu_custom_call.1} parent=1 // pred_check_branch
      %715 = sbr.rel (0) target = $region25
    $region24: #{tpu_custom_call.1} parent=1 // pred_region
      %s717 = ssub.s32 4096, 4096
      %718 = vsyncadd [#allocation9], %s717
      %s719 = sshll.u32 [#allocation8], 4
      %s720 = int_to_ptr.vmem [resolvable:$true] %s719
      %725 = dma.vmem_to_hbm [thread:$0]  %s720, 4096, %s3, [#allocation9], 128, 128, 8
    $region25: #{tpu_custom_call.1} parent=1 // pred_fallthru
      _
    // Predicated region
    $region26: #{tpu_custom_call.1} parent=1 // pred_check
      _
    $region27: #{tpu_custom_call.1} parent=1 // pred_check_branch
      %727 = sbr.rel (0) target = $region29
    $region28: #{tpu_custom_call.1} parent=1 // pred_region
      %s729 = ssub.s32 4096, 4096
      %730 = vsyncadd [#allocation9], %s729
      %s731 = sshll.u32 [#allocation10], 4
      %s732 = int_to_ptr.vmem [resolvable:$true] %s731
      %737 = dma.vmem_to_hbm [thread:$0]  %s732, 4096, %s4, [#allocation9], 128, 128, 8
    $region29: #{tpu_custom_call.1} parent=1 // pred_fallthru
      _
    // Predicated region
    $region30: #{tpu_custom_call.1} parent=1 // pred_check
      _
    $region31: #{tpu_custom_call.1} parent=1 // pred_check_branch
      %739 = sbr.rel (0) target = $region33
    $region32: #{tpu_custom_call.1} parent=1 // pred_region
      %740 = dma.done [#allocation4], 4096
    $region33: #{tpu_custom_call.1} parent=1 // pred_fallthru
      _
    // Predicated region
    $region34: #{tpu_custom_call.1} parent=1 // pred_check
      _
    $region35: #{tpu_custom_call.1} parent=1 // pred_check_branch
      %742 = sbr.rel (0) target = $region37
    $region36: #{tpu_custom_call.1} parent=1 // pred_region
      %743 = dma.done [#allocation9], 4096
    $region37: #{tpu_custom_call.1} parent=1 // pred_fallthru
      _
    // Predicated region
    $region38: #{tpu_custom_call.1} parent=1 // pred_check
      _
    $region39: #{tpu_custom_call.1} parent=1 // pred_check_branch
      %745 = sbr.rel (0) target = $region41
    $region40: #{tpu_custom_call.1} parent=1 // pred_region
      %746 = dma.done [#allocation9], 4096
    $region41: #{tpu_custom_call.1} parent=1 // pred_fallthru
      _
    %747 = vsyncpa [#allocation3], 1
    %748 = vsyncpa [#allocation6], 1
    %749 = vsyncpa [#allocation4], 1
    %750 = vsyncpa [#allocation9], 1

</llo_original>
